<compile_context>
chip_gen: v7x
topology: tpu7x:2x2x1
jax: 0.10.0
libtpu: 0.0.40
codegen_flags: <defaults>
</compile_context>

<pallas_src>
import functools

import jax
import jax.numpy as jnp
from jax import lax
from jax.experimental import pallas as pl
from jax.experimental.pallas import tpu as pltpu


def _round_up(x: int, m: int) -> int:
    return ((x + m - 1) // m) * m


def _choose_tile(full: int, target: int, gran: int) -> int:
    """Largest tile t (multiple of gran, t <= max(target, gran)) dividing round_up(full, gran)."""
    fullp = _round_up(max(full, 1), gran)
    target = max((target // gran) * gran, gran)
    if fullp <= target:
        return fullp
    t = target
    while t > gran:
        if fullp % t == 0:
            return t
        t -= gran
    return gran  # gran always divides fullp


def _vmem_budget_bytes() -> int:
    """~0.8x of physical VMEM for this generation (headroom for compiler scratch)."""
    cap = 64 * 1024 * 1024
    try:
        info = pltpu.get_tpu_info()
        cap = int(getattr(info, "vmem_capacity_bytes", cap) or cap)
    except Exception:
        pass
    return int(cap * 0.8)


def _plan_tiles(M, K, N, compute_dtype, out_dtype):
    cbytes = jnp.dtype(compute_dtype).itemsize
    obytes = jnp.dtype(out_dtype).itemsize
    # bf16 packs 2 rows per sublane -> min sublane granularity 16 (32 for int8).
    m_gran = 8 if cbytes == 4 else (16 if cbytes == 2 else 32)

    budget = _vmem_budget_bytes()
    big_part = budget >= 80 * 1024 * 1024  # 128-MiB VMEM parts (v5e/v6e)

    Mp = _round_up(M, m_gran)
    Np = _round_up(N, 128)

    # --- M tile: small-M path keeps all of M in one block -> W streamed once.
    if Mp <= 512:
        tm = Mp
    else:
        tm = _choose_tile(M, 512 if big_part else 256, m_gran)

    # --- N tile.
    tn = _choose_tile(N, 512, 128)
    # Megacore (v7x): keep >= 2 blocks on a parallel axis when M has only one.
    if (Mp // tm) <= 1 and (Np // tn) < 2 and Np >= 256:
        tn = _choose_tile(N, Np // 2, 128)

    # --- K slab: as large as the VMEM budget allows (ideally the full K).
    use_scratch = jnp.dtype(out_dtype) != jnp.dtype(jnp.float32)
    fixed = 2 * tm * tn * obytes + (tm * tn * 4 if use_scratch else 0) + 2 * tn * 4
    per_k = 2 * (tm + tn) * cbytes  # double-buffered x and W slabs, per K column
    tk_budget = max((budget - fixed) // per_k, 512)
    tk = _choose_tile(K, int(tk_budget), 128)

    need = fixed + per_k * tk
    vmem_limit = int(min(budget, max(int(need * 1.25), 32 * 1024 * 1024)))
    return tm, tn, tk, vmem_limit


def _linear_kernel_f32(x_ref, w_ref, b_ref, o_ref):
    """f32 output: accumulate directly into o_ref (no scratch, no flush copy).

    x_ref: (tm, tk)  w_ref: (tn, tk)  b_ref: (1, tn) f32  o_ref: (tm, tn) f32
    """
    k = pl.program_id(2)
    part = lax.dot_general(
        x_ref[...],
        w_ref[...],
        dimension_numbers=(((1,), (1,)), ((), ())),  # contract K (last axis of both)
        preferred_element_type=jnp.float32,
    )

    @pl.when(k == 0)
    def _():
        o_ref[...] = part

    @pl.when(k > 0)
    def _():
        o_ref[...] += part

    @pl.when(k == pl.num_programs(2) - 1)
    def _():
        o_ref[...] += b_ref[...]


def _linear_kernel_scratch(x_ref, w_ref, b_ref, o_ref, acc_ref):
    """Generic output dtype: f32 scratch accumulator, cast on final flush."""
    k = pl.program_id(2)

    @pl.when(k == 0)
    def _():
        acc_ref[...] = jnp.zeros_like(acc_ref)

    acc_ref[...] += lax.dot_general(
        x_ref[...],
        w_ref[...],
        dimension_numbers=(((1,), (1,)), ((), ())),
        preferred_element_type=jnp.float32,
    )

    @pl.when(k == pl.num_programs(2) - 1)
    def _():
        o_ref[...] = (acc_ref[...] + b_ref[...]).astype(o_ref.dtype)


@functools.partial(
    jax.jit,
    static_argnames=("tm", "tn", "tk", "compute_dtype", "out_dtype", "vmem_limit"),
)
def _linear_impl(x2, weight, bias, *, tm, tn, tk, compute_dtype, out_dtype, vmem_limit):
    M, K = x2.shape
    N = weight.shape[0]

    # Tiles were chosen to divide the minimally padded dims, so these pads are
    # at most (gran - 1) rows/cols and usually no-ops; they fuse with the cast.
    Mp = _round_up(M, tm)
    Np = _round_up(N, tn)
    Kp = _round_up(K, tk)

    xw = x2.astype(compute_dtype)
    if (Mp, Kp) != (M, K):
        xw = jnp.pad(xw, ((0, Mp - M), (0, Kp - K)))
    ww = weight.astype(compute_dtype)
    if (Np, Kp) != (N, K):
        ww = jnp.pad(ww, ((0, Np - N), (0, Kp - K)))
    bb = bias.astype(jnp.float32)
    if Np != N:
        bb = jnp.pad(bb, (0, Np - N))
    bb = bb.reshape(1, Np)

    # Grid: N blocks outer, M blocks middle, K (reduction) innermost.  With a
    # full-K slab (tk == Kp) the W block index is constant across M blocks, so
    # its DMA is skipped; in the small-M path W is streamed exactly once.
    grid = (Np // tn, Mp // tm, Kp // tk)

    f32_out = jnp.dtype(out_dtype) == jnp.dtype(jnp.float32)
    kernel = _linear_kernel_f32 if f32_out else _linear_kernel_scratch
    scratch = [] if f32_out else [pltpu.VMEM((tm, tn), jnp.float32)]

    cbytes = jnp.dtype(compute_dtype).itemsize
    obytes = jnp.dtype(out_dtype).itemsize
    cost = pl.CostEstimate(
        flops=2 * Mp * Np * Kp,
        bytes_accessed=int(
            Mp * Kp * cbytes
            + Np * Kp * cbytes * max(1, (Mp // tm) if Kp != tk else 1)
            + Mp * Np * obytes
            + Np * 4
        ),
        transcendentals=0,
    )

    out = pl.pallas_call(
        kernel,
        out_shape=jax.ShapeDtypeStruct((Mp, Np), out_dtype),
        grid_spec=pltpu.PrefetchScalarGridSpec(
            num_scalar_prefetch=0,
            grid=grid,
            in_specs=[
                pl.BlockSpec((tm, tk), lambda j, i, k: (i, k)),  # x slab
                pl.BlockSpec((tn, tk), lambda j, i, k: (j, k)),  # W slab, (N, K) layout
                pl.BlockSpec((1, tn), lambda j, i, k: (0, j)),   # bias
            ],
            out_specs=pl.BlockSpec((tm, tn), lambda j, i, k: (i, j)),
            scratch_shapes=scratch,
        ),
        compiler_params=pltpu.CompilerParams(
            dimension_semantics=("parallel", "parallel", "arbitrary"),
            vmem_limit_bytes=vmem_limit,
        ),
        cost_estimate=cost,
    )(xw, ww, bb)

    if (Mp, Np) != (M, N):
        out = out[:M, :N]
    return out


def linear_in_projection(x, weight, bias, *, compute_dtype=jnp.bfloat16):
    """Pallas TPU equivalent of torch.nn.functional.linear(x, weight, bias).

    x:      (..., K)
    weight: (N, K)  -- PyTorch layout (out_features, in_features), used as-is.
    bias:   (N,)
    Inputs are cast to `compute_dtype` (default bf16) for full MXU throughput;
    accumulation is f32; output keeps x's dtype.
    """
    *lead, K = x.shape
    N, K_w = weight.shape
    assert K == K_w, f"in_features mismatch: x has {K}, weight has {K_w}"
    M = 1
    for d in lead:
        M *= d
    out_dtype = jnp.dtype(x.dtype)

    tm, tn, tk, vmem_limit = _plan_tiles(M, K, N, compute_dtype, out_dtype)

    out = _linear_impl(
        x.reshape(M, K),
        weight,
        bias,
        tm=tm,
        tn=tn,
        tk=tk,
        compute_dtype=compute_dtype,
        out_dtype=out_dtype,
        vmem_limit=vmem_limit,
    )
    return out.reshape(*lead, N)


if __name__ == "__main__":
    # Small shapes consistent with the module: x (batch, seq, in), weight (out, in).
    batch, seq, in_features, out_features = 2, 8, 128, 128

    key = jax.random.PRNGKey(0)
    kx, kw, kb = jax.random.split(key, 3)

    x = jax.random.normal(kx, (batch, seq, in_features), dtype=jnp.float32)
    weight = jax.random.normal(kw, (out_features, in_features), dtype=jnp.float32) * 0.02
    bias = jax.random.normal(kb, (out_features,), dtype=jnp.float32) * 0.01

    y_ref = x @ weight.T + bias

    # Default (bf16 compute, f32 output -> accumulate-into-output kernel).
    y = jax.block_until_ready(linear_in_projection(x, weight, bias))
    assert y.shape == (batch, seq, out_features)
    assert jnp.allclose(y, y_ref, atol=5e-2, rtol=5e-2)

    # bf16 inputs (bf16 output -> scratch-accumulator kernel path).
    y_bf = jax.block_until_ready(
        linear_in_projection(x.astype(jnp.bfloat16), weight, bias)
    )
    assert y_bf.shape == (batch, seq, out_features)
    assert jnp.allclose(y_bf.astype(jnp.float32), y_ref, atol=5e-2, rtol=5e-2)

    print("KERNEL_OK")
</pallas_src>

<mosaic_0001>
module attributes {stable_mosaic.version = 11 : i64} {
  func.func @_linear_kernel_f32(%arg0: i32, %arg1: i32, %arg2: i32, %arg3: memref<16x128xbf16, #tpu.memory_space<vmem>>, %arg4: memref<128x128xbf16, #tpu.memory_space<vmem>>, %arg5: memref<1x128xf32, #tpu.memory_space<vmem>>, %arg6: memref<16x128xf32, #tpu.memory_space<vmem>>) attributes {dimension_semantics = [#tpu.dimension_semantics<parallel>, #tpu.dimension_semantics<parallel>, #tpu.dimension_semantics<arbitrary>], iteration_bounds = array<i64: 1, 1, 1>, scalar_prefetch = 0 : i64, scratch_operands = 0 : i64, tpu.core_type = #tpu.core_type<tc>, window_params = [{transform_indices = @transform_0, window_bounds = array<i64: 16, 128>}, {transform_indices = @transform_1, window_bounds = array<i64: 128, 128>}, {transform_indices = @transform_2, window_bounds = array<i64: 1, 128>}, {transform_indices = @transform_3, window_bounds = array<i64: 16, 128>}]} {
    %c0 = arith.constant 0 : index
    %c0_0 = arith.constant 0 : index
    %0 = vector.load %arg3[%c0, %c0_0] : memref<16x128xbf16, #tpu.memory_space<vmem>>, vector<16x128xbf16>
    %c0_1 = arith.constant 0 : index
    %c0_2 = arith.constant 0 : index
    %1 = vector.load %arg4[%c0_1, %c0_2] : memref<128x128xbf16, #tpu.memory_space<vmem>>, vector<128x128xbf16>
    %cst = arith.constant dense<0.000000e+00> : vector<16x128xf32>
    %2 = tpu.matmul %0, %1, %cst {dimension_numbers = #tpu.dot_dimension_numbers<[1], [1], [0], [0], [0, 0, 1, 0], [], []>} : vector<16x128xbf16>, vector<128x128xbf16>, vector<16x128xf32> -> vector<16x128xf32>
    %c0_i32 = arith.constant 0 : i32
    %3 = arith.cmpi eq, %arg2, %c0_i32 : i32
    %4 = arith.extui %3 : i1 to i32
    %c0_i32_3 = arith.constant 0 : i32
    %5 = arith.cmpi ne, %4, %c0_i32_3 : i32
    scf.if %5 {
      %c0_8 = arith.constant 0 : index
      %c0_9 = arith.constant 0 : index
      %12 = vector.load %arg6[%c0_8, %c0_9] : memref<16x128xf32, #tpu.memory_space<vmem>>, vector<16x128xf32>
      tpu.vector_store %arg6[%c0_8, %c0_9], %2 {strides = array<i32>} : memref<16x128xf32, #tpu.memory_space<vmem>>, vector<16x128xf32>,
    } else {
    }
    %c0_i32_4 = arith.constant 0 : i32
    %6 = arith.cmpi sgt, %arg2, %c0_i32_4 : i32
    %7 = arith.extui %6 : i1 to i32
    %c0_i32_5 = arith.constant 0 : i32
    %8 = arith.cmpi ne, %7, %c0_i32_5 : i32
    scf.if %8 {
      %c0_8 = arith.constant 0 : index
      %c0_9 = arith.constant 0 : index
      %12 = vector.load %arg6[%c0_8, %c0_9] : memref<16x128xf32, #tpu.memory_space<vmem>>, vector<16x128xf32>
      %13 = arith.addf %12, %2 : vector<16x128xf32>
      %c0_10 = arith.constant 0 : index
      %c0_11 = arith.constant 0 : index
      %14 = vector.load %arg6[%c0_10, %c0_11] : memref<16x128xf32, #tpu.memory_space<vmem>>, vector<16x128xf32>
      tpu.vector_store %arg6[%c0_10, %c0_11], %13 {strides = array<i32>} : memref<16x128xf32, #tpu.memory_space<vmem>>, vector<16x128xf32>,
    } else {
    }
    %c0_i32_6 = arith.constant 0 : i32
    %9 = arith.cmpi eq, %arg2, %c0_i32_6 : i32
    %10 = arith.extui %9 : i1 to i32
    %c0_i32_7 = arith.constant 0 : i32
    %11 = arith.cmpi ne, %10, %c0_i32_7 : i32
    scf.if %11 {
      %c0_8 = arith.constant 0 : index
      %c0_9 = arith.constant 0 : index
      %12 = vector.load %arg6[%c0_8, %c0_9] : memref<16x128xf32, #tpu.memory_space<vmem>>, vector<16x128xf32>
      %c0_10 = arith.constant 0 : index
      %c0_11 = arith.constant 0 : index
      %13 = vector.load %arg5[%c0_10, %c0_11] : memref<1x128xf32, #tpu.memory_space<vmem>>, vector<1x128xf32>
      %14 = vector.broadcast %13 : vector<1x128xf32> to vector<16x128xf32>
      %15 = arith.addf %12, %14 : vector<16x128xf32>
      %c0_12 = arith.constant 0 : index
      %c0_13 = arith.constant 0 : index
      %16 = vector.load %arg6[%c0_12, %c0_13] : memref<16x128xf32, #tpu.memory_space<vmem>>, vector<16x128xf32>
      tpu.vector_store %arg6[%c0_12, %c0_13], %15 {strides = array<i32>} : memref<16x128xf32, #tpu.memory_space<vmem>>, vector<16x128xf32>,
    } else {
    }
    return
  }
  func.func @transform_0(%arg0: i32, %arg1: i32, %arg2: i32) -> (i32, i32) {
    %c0_i32 = arith.constant 0 : i32
    return %arg1, %arg2 : i32, i32
  }
  func.func @transform_1(%arg0: i32, %arg1: i32, %arg2: i32) -> (i32, i32) {
    %c0_i32 = arith.constant 0 : i32
    return %arg0, %arg2 : i32, i32
  }
  func.func @transform_2(%arg0: i32, %arg1: i32, %arg2: i32) -> (i32, i32) {
    %c0_i32 = arith.constant 0 : i32
    %c0_i32_0 = arith.constant 0 : i32
    return %c0_i32, %arg0 : i32, i32
  }
  func.func @transform_3(%arg0: i32, %arg1: i32, %arg2: i32) -> (i32, i32) {
    %c0_i32 = arith.constant 0 : i32
    return %arg1, %arg0 : i32, i32
  }
}

</mosaic_0001>

<llo_original>
// kernel: _linear_impl.1
$region0: #{_linear_impl.1}
  #allocation0 [shape = 'u32[]', space=smem, size = 0x4, offset = 0x4, fixed_abs, tag = 'smem constant byte address 0x4 - core index']
  #allocation1 [shape = 'u32[144,128]{1,0:T(1,128)}', space=vmem, size = 0x12000, scoped, tag = 'internal scratch']
  %s0 = inlined_call_operand.vmem [shape: bf16[16,128], index: 0, kind: input, shape index: {}]
  %s1 = inlined_call_operand.vmem [shape: bf16[128,128], index: 1, kind: input, shape index: {}]
  %s2 = inlined_call_operand.vmem [shape: f32[1,128], index: 2, kind: input, shape index: {}]
  %s3 = inlined_call_operand.hbm [shape: f32[16,128], index: 3, kind: output, shape index: {}]
  %s4 = sld [smem:[#allocation0]]
  $region34: #{_linear_impl.1} parent=0
    _
  %s6 = ssub.s32 1, %s4
  %s7 = scalar_select 0, %s6, %s4
  $region1: #{_linear_impl.1} parent=0
    #allocation2 [shape = 'u8[8192]{0}', space=vmem, size = 0x2000, scoped, tag = 'output window, operand 0, single buffered']
    #allocation3 [shape = 's32[1]{0}', space=sflag, size = 0x4, scoped, tag = 'scoped memory for _linear_impl.1']
    %8 = vsyncpa [#allocation3], 0
    // Predicated region
    $region2: #{_linear_impl.1} parent=1 // pred_check
      _
    $region3: #{_linear_impl.1} parent=1 // pred_check_branch
      %10 = sbr.rel (0) target = $region5
    $region4: #{_linear_impl.1} parent=1 // pred_region
      _
    $region5: #{_linear_impl.1} parent=1 // pred_fallthru
      _
    // Predicated region
    $region6: #{_linear_impl.1} parent=1 // pred_check
      _
    $region7: #{_linear_impl.1} parent=1 // pred_check_branch
      %12 = sbr.rel (0) target = $region9
    $region8: #{_linear_impl.1} parent=1 // pred_region
      _
    $region9: #{_linear_impl.1} parent=1 // pred_fallthru
      _
    // Predicated region
    $region10: #{_linear_impl.1} parent=1 // pred_check
      _
    $region11: #{_linear_impl.1} parent=1 // pred_check_branch
      %14 = sbr.rel (0) target = $region13
    $region12: #{_linear_impl.1} parent=1 // pred_region
      _
    $region13: #{_linear_impl.1} parent=1 // pred_fallthru
      _
    %v16 = vld [vmem:[%s0] sm:$0xf]
    %v17 = vld [vmem:[%s0 + $0x4] sm:$0xf]
    %v18 = vld [vmem:[%s1] sm:$0xf]
    %v19 = vld [vmem:[%s1 + $0x4] sm:$0xf]
    %v20 = vld [vmem:[%s1 + $0x8] sm:$0xf]
    %v21 = vld [vmem:[%s1 + $0xc] sm:$0xf]
    %v22 = vld [vmem:[%s1 + $0x10] sm:$0xf]
    %v23 = vld [vmem:[%s1 + $0x14] sm:$0xf]
    %v24 = vld [vmem:[%s1 + $0x18] sm:$0xf]
    %v25 = vld [vmem:[%s1 + $0x1c] sm:$0xf]
    %v26 = vld [vmem:[%s1 + $0x20] sm:$0xf]
    %v27 = vld [vmem:[%s1 + $0x24] sm:$0xf]
    %v28 = vld [vmem:[%s1 + $0x28] sm:$0xf]
    %v29 = vld [vmem:[%s1 + $0x2c] sm:$0xf]
    %v30 = vld [vmem:[%s1 + $0x30] sm:$0xf]
    %v31 = vld [vmem:[%s1 + $0x34] sm:$0xf]
    %v32 = vld [vmem:[%s1 + $0x38] sm:$0xf]
    %v33 = vld [vmem:[%s1 + $0x3c] sm:$0xf]
    %v36 = vunpack.c.l.b16 %v16
    %v37 = vunpack.c.l.b16 %v17
    %v38 = vpack.c.b16 %v37, %v36
    %v56 = vunpack.c.l.b16 %v18
    %v57 = vunpack.c.l.b16 %v19
    %v58 = vunpack.c.l.b16 %v20
    %v59 = vunpack.c.l.b16 %v21
    %v60 = vunpack.c.l.b16 %v22
    %v61 = vunpack.c.l.b16 %v23
    %v62 = vunpack.c.l.b16 %v24
    %v63 = vunpack.c.l.b16 %v25
    %v64 = vunpack.c.l.b16 %v26
    %v65 = vunpack.c.l.b16 %v27
    %v66 = vunpack.c.l.b16 %v28
    %v67 = vunpack.c.l.b16 %v29
    %v68 = vunpack.c.l.b16 %v30
    %v69 = vunpack.c.l.b16 %v31
    %v70 = vunpack.c.l.b16 %v32
    %v71 = vunpack.c.l.b16 %v33
    %v72 = vpack.c.b16 %v57, %v56
    %v73 = vpack.c.b16 %v59, %v58
    %v74 = vpack.c.b16 %v61, %v60
    %v75 = vpack.c.b16 %v63, %v62
    %v76 = vpack.c.b16 %v65, %v64
    %v77 = vpack.c.b16 %v67, %v66
    %v78 = vpack.c.b16 %v69, %v68
    %v79 = vpack.c.b16 %v71, %v70
    %88 = vmatprep.subr.bf16.mxu0 0
    %89 = vmatpush1.bf16.xpose.msra.mxu0 %v72
    %90 = vmatprep.subr.bf16.mxu0 0
    %91 = vmatpush1.bf16.xpose.msra.mxu0 %v73
    %92 = vmatprep.subr.bf16.mxu0 0
    %93 = vmatpush1.bf16.xpose.msra.mxu0 %v74
    %94 = vmatprep.subr.bf16.mxu0 0
    %95 = vmatpush1.bf16.xpose.msra.mxu0 %v75
    %96 = vmatprep.subr.bf16.mxu0 0
    %97 = vmatpush1.bf16.xpose.msra.mxu0 %v76
    %98 = vmatprep.subr.bf16.mxu0 0
    %99 = vmatpush1.bf16.xpose.msra.mxu0 %v77
    %100 = vmatprep.subr.bf16.mxu0 0
    %101 = vmatpush1.bf16.xpose.msra.mxu0 %v78
    %102 = vmatprep.subr.bf16.mxu0 0
    %103 = vmatpush1.bf16.xpose.msra.mxu0 %v79
    %104 = vmatprep.subr.bf16.mxu0 0
    %105 = vmatpush1.bf16.xpose.msra.mxu0 0
    %106 = vmatprep.subr.bf16.mxu0 0
    %107 = vmatpush1.bf16.xpose.msra.mxu0 0
    %108 = vmatprep.subr.bf16.mxu0 0
    %109 = vmatpush1.bf16.xpose.msra.mxu0 0
    %110 = vmatprep.subr.bf16.mxu0 0
    %111 = vmatpush1.bf16.xpose.msra.mxu0 0
    %112 = vmatprep.subr.bf16.mxu0 0
    %113 = vmatpush1.bf16.xpose.msra.mxu0 0
    %114 = vmatprep.subr.bf16.mxu0 0
    %115 = vmatpush1.bf16.xpose.msra.mxu0 0
    %116 = vmatprep.subr.bf16.mxu0 0
    %117 = vmatpush1.bf16.xpose.msra.mxu0 0
    %118 = vmatprep.subr.bf16.mxu0 0
    %119 = vmatpush1.bf16.xpose.msra.mxu0 0
    %120 = vmatprep.mubr.bf16.mxu0 0
    %121 = vmatmul.mubr.bf16.gmra.mrb[0].mxu0 %v38
    %v122 = vpop.f32.mrb[0].mxu0
    %v123 = vadd.f32 0.0, %v122
    %v124 = vpop.f32.mrb[0].mxu0
    %v125 = vpop.f32.mrb[0].mxu0
    %v126 = vadd.f32 0.0, %v125
    %v127 = vpop.f32.mrb[0].mxu0
    %128 = vdwg.mxu0
    %p129 = scmp.eq.s32.totalorder 0, 0
    // Predicated region
    $region14: #{_linear_impl.1} parent=1 // pred_check
      %p130 = pneg %p129
    $region15: #{_linear_impl.1} parent=1 // pred_check_branch
      %132 = sbr.rel (%p130) target = $region17
    $region16: #{_linear_impl.1} parent=1 // pred_region
      %133 = vst [vmem:[#allocation2] sm:$0xff] %v123
      %134 = vst [vmem:[#allocation2 + $0x8] sm:$0xff] %v126
    $region17: #{_linear_impl.1} parent=1 // pred_fallthru
      _
    %p135 = scmp.gt.s32.totalorder 0, 0
    // Predicated region
    $region18: #{_linear_impl.1} parent=1 // pred_check
      %p136 = pneg %p135
    $region19: #{_linear_impl.1} parent=1 // pred_check_branch
      %138 = sbr.rel (%p136) target = $region21
    $region20: #{_linear_impl.1} parent=1 // pred_region
      %v139 = vld [vmem:[#allocation2] sm:$0xff]
      %v140 = vld [vmem:[#allocation2 + $0x8] sm:$0xff]
      %v141 = vadd.f32 %v139, %v123
      %v142 = vadd.f32 %v140, %v126
      %143 = vst [vmem:[#allocation2] sm:$0xff] %v141
      %144 = vst [vmem:[#allocation2 + $0x8] sm:$0xff] %v142
    $region21: #{_linear_impl.1} parent=1 // pred_fallthru
      _
    // Predicated region
    $region22: #{_linear_impl.1} parent=1 // pred_check
      %p145 = pneg %p129
    $region23: #{_linear_impl.1} parent=1 // pred_check_branch
      %147 = sbr.rel (%p145) target = $region25
    $region24: #{_linear_impl.1} parent=1 // pred_region
      %v148 = vld [vmem:[#allocation2] sm:$0xff]
      %v149 = vld [vmem:[#allocation2 + $0x8] sm:$0xff]
      %v150 = vld [vmem:[%s2] sm:$0x1]
      %v152 = vlaneseq
      %v153 = vshrl.u32 %v152, 7
      %v154 = vsub.s32 0, %v153
      %v155 = vrot.slane %v150, %v154
      %v157 = vadd.f32 %v148, %v155
      %v158 = vadd.f32 %v149, %v155
      %159 = vst [vmem:[#allocation2] sm:$0xff] %v157
      %160 = vst [vmem:[#allocation2 + $0x8] sm:$0xff] %v158
    $region25: #{_linear_impl.1} parent=1 // pred_fallthru
      _
    // Predicated region
    $region26: #{_linear_impl.1} parent=1 // pred_check
      _
    $region27: #{_linear_impl.1} parent=1 // pred_check_branch
      %162 = sbr.rel (0) target = $region29
    $region28: #{_linear_impl.1} parent=1 // pred_region
      %s164 = ssub.s32 256, 256
      %165 = vsyncadd [#allocation3], %s164
      %s166 = sshll.u32 [#allocation2], 4
      %s167 = int_to_ptr.vmem [resolvable:$true] %s166
      %172 = dma.vmem_to_hbm [thread:$0]  %s167, 256, %s3, [#allocation3], 128, 128, 8
    $region29: #{_linear_impl.1} parent=1 // pred_fallthru
      _
    // Predicated region
    $region30: #{_linear_impl.1} parent=1 // pred_check
      _
    $region31: #{_linear_impl.1} parent=1 // pred_check_branch
      %174 = sbr.rel (0) target = $region33
    $region32: #{_linear_impl.1} parent=1 // pred_region
      %175 = dma.done [#allocation3], 256
    $region33: #{_linear_impl.1} parent=1 // pred_fallthru
      _
    %176 = vsyncpa [#allocation3], 1

</llo_original>
